<compile_context>
chip_gen: v5e
topology: v5e:2x2
jax: 0.10.0
libtpu: 0.0.40
codegen_flags: <defaults>
</compile_context>

<pallas_src>
import jax
import jax.numpy as jnp
from jax.experimental import pallas as pl
from jax.experimental.pallas import tpu as pltpu

STATE_DIM = 4      # CartPole-v1 observation space
HIDDEN_DIM = 16
OUT_DIM = 1


def value_mlp_kernel(s_ref, w1_ref, b1_ref, w2_ref, b2_ref, out_ref):
    # s_ref:  (STATE_DIM, TB)   batch on lanes
    # w1_ref: (HIDDEN_DIM, STATE_DIM)  (PyTorch layout)
    # b1_ref: (HIDDEN_DIM, 1)
    # w2_ref: (HIDDEN_DIM, 1)   (PyTorch (1, HIDDEN_DIM) transposed)
    # b2_ref: (1, 1)
    s = s_ref[...]

    # Hidden layer: (16, 4) @ (4, TB) -> (16, TB); f32 accumulation.
    h = jnp.dot(w1_ref[...], s, preferred_element_type=jnp.float32)
    h = jnp.maximum(h + b1_ref[...], 0.0)          # bias broadcast over lanes

    # Output layer on VPU + XLU (N=1 matmul would waste the MXU):
    # elementwise multiply with broadcast w2 column, sublane-reduce to (1, TB).
    v = jnp.sum(h * w2_ref[...], axis=0, keepdims=True) + b2_ref[...]

    out_ref[...] = v.astype(out_ref.dtype)


def value_forward(s, w1, b1, w2, b2, *, tb=2048):
    """Value-network forward pass.

    s:  (B, STATE_DIM) f32
    w1: (HIDDEN_DIM, STATE_DIM) f32   (PyTorch nn.Linear weight layout)
    b1: (HIDDEN_DIM,) f32
    w2: (OUT_DIM, HIDDEN_DIM) f32
    b2: (OUT_DIM,) f32
    returns (B, OUT_DIM) f32
    """
    B = s.shape[0]

    # Batch tile: multiple of 128 lanes; cap at `tb` for large batches.
    tb = min(tb, pl.cdiv(B, 128) * 128)
    bp = pl.cdiv(B, tb) * tb
    grid = (bp // tb,)

    # Lane-dense, zero-padded input: (STATE_DIM, B_padded).
    s_t = jnp.zeros((STATE_DIM, bp), jnp.float32).at[:, :B].set(s.T.astype(jnp.float32))

    b1c = b1.reshape(HIDDEN_DIM, 1).astype(jnp.float32)
    w2c = w2.reshape(OUT_DIM, HIDDEN_DIM).T.astype(jnp.float32)   # (HIDDEN_DIM, 1)
    b2c = b2.reshape(1, 1).astype(jnp.float32)

    out_t = pl.pallas_call(
        value_mlp_kernel,
        out_shape=jax.ShapeDtypeStruct((OUT_DIM, bp), jnp.float32),
        grid=grid,
        in_specs=[
            pl.BlockSpec((STATE_DIM, tb), lambda i: (0, i)),        # streamed batch tile
            pl.BlockSpec((HIDDEN_DIM, STATE_DIM), lambda i: (0, 0)),  # resident weights
            pl.BlockSpec((HIDDEN_DIM, 1), lambda i: (0, 0)),
            pl.BlockSpec((HIDDEN_DIM, 1), lambda i: (0, 0)),
            pl.BlockSpec((1, 1), lambda i: (0, 0)),
        ],
        out_specs=pl.BlockSpec((OUT_DIM, tb), lambda i: (0, i)),
        compiler_params=pltpu.CompilerParams(
            dimension_semantics=("parallel",)),
    )(s_t, w1.astype(jnp.float32), b1c, w2c, b2c)

    # Back to the PyTorch-facing (B, 1) layout.
    return out_t[:, :B].T


def init_params(key):
    """Deterministic init mimicking PyTorch nn.Linear default U(-1/sqrt(fan_in), +).

    Weights are kept in PyTorch's (out_features, in_features) layout.
    """
    k1, k2, k3, k4 = jax.random.split(key, 4)
    bound1 = 1.0 / jnp.sqrt(STATE_DIM)
    bound2 = 1.0 / jnp.sqrt(HIDDEN_DIM)
    w1 = jax.random.uniform(k1, (HIDDEN_DIM, STATE_DIM), jnp.float32, -bound1, bound1)
    b1 = jax.random.uniform(k2, (HIDDEN_DIM,), jnp.float32, -bound1, bound1)
    w2 = jax.random.uniform(k3, (OUT_DIM, HIDDEN_DIM), jnp.float32, -bound2, bound2)
    b2 = jax.random.uniform(k4, (OUT_DIM,), jnp.float32, -bound2, bound2)
    return w1, b1, w2, b2


if __name__ == "__main__":
    key = jax.random.PRNGKey(0)
    pkey, skey = jax.random.split(key)
    w1, b1, w2, b2 = init_params(pkey)

    B = 8  # small batch of CartPole states
    s = jax.random.normal(skey, (B, STATE_DIM), jnp.float32)

    v = value_forward(s, w1, b1, w2, b2)
    v = jax.block_until_ready(v)

    # Pure-JAX reference check (PyTorch layout: y = relu(s @ W1^T + b1) @ W2^T + b2)
    ref = jnp.maximum(s @ w1.T + b1[None, :], 0.0) @ w2.T + b2[None, :]
    assert v.shape == (B, OUT_DIM)
    assert jnp.allclose(v, ref, atol=1e-5, rtol=1e-5)

    # TODO(synk): only the Value.forward pass is a kernel; the gym env / SVRG
    # training loop in the reference script has no Pallas equivalent.
    print("KERNEL_OK")
</pallas_src>

<mosaic_0001>
module attributes {stable_mosaic.version = 11 : i64} {
  func.func @value_mlp_kernel(%arg0: i32, %arg1: memref<4x128xf32, #tpu.memory_space<vmem>>, %arg2: memref<16x4xf32, #tpu.memory_space<vmem>>, %arg3: memref<16x1xf32, #tpu.memory_space<vmem>>, %arg4: memref<16x1xf32, #tpu.memory_space<vmem>>, %arg5: memref<1x1xf32, #tpu.memory_space<vmem>>, %arg6: memref<1x128xf32, #tpu.memory_space<vmem>>) attributes {dimension_semantics = [#tpu.dimension_semantics<parallel>], iteration_bounds = array<i64: 1>, scalar_prefetch = 0 : i64, scratch_operands = 0 : i64, tpu.core_type = #tpu.core_type<tc>, window_params = [{transform_indices = @transform_0, window_bounds = array<i64: 4, 128>}, {pipeline_mode = #tpu.pipeline_mode<synchronous>, transform_indices = @transform_1, window_bounds = array<i64: 16, 4>}, {pipeline_mode = #tpu.pipeline_mode<synchronous>, transform_indices = @transform_2, window_bounds = array<i64: 16, 1>}, {pipeline_mode = #tpu.pipeline_mode<synchronous>, transform_indices = @transform_3, window_bounds = array<i64: 16, 1>}, {pipeline_mode = #tpu.pipeline_mode<synchronous>, transform_indices = @transform_4, window_bounds = array<i64: 1, 1>}, {transform_indices = @transform_5, window_bounds = array<i64: 1, 128>}]} {
    %c0 = arith.constant 0 : index
    %c0_0 = arith.constant 0 : index
    %0 = vector.load %arg1[%c0, %c0_0] : memref<4x128xf32, #tpu.memory_space<vmem>>, vector<4x128xf32>
    %c0_1 = arith.constant 0 : index
    %c0_2 = arith.constant 0 : index
    %1 = vector.load %arg2[%c0_1, %c0_2] : memref<16x4xf32, #tpu.memory_space<vmem>>, vector<16x4xf32>
    %cst = arith.constant dense<0.000000e+00> : vector<16x128xf32>
    %2 = tpu.matmul %1, %0, %cst {dimension_numbers = #tpu.dot_dimension_numbers<[1], [0], [0], [1], [0, 0, 1, 1], [], []>} : vector<16x4xf32>, vector<4x128xf32>, vector<16x128xf32> -> vector<16x128xf32>
    %c0_3 = arith.constant 0 : index
    %c0_4 = arith.constant 0 : index
    %3 = vector.load %arg3[%c0_3, %c0_4] : memref<16x1xf32, #tpu.memory_space<vmem>>, vector<16x1xf32>
    %4 = vector.broadcast %3 : vector<16x1xf32> to vector<16x128xf32>
    %5 = arith.addf %2, %4 : vector<16x128xf32>
    %cst_5 = arith.constant 0.000000e+00 : f32
    %6 = vector.broadcast %cst_5 : f32 to vector<16x128xf32>
    %7 = arith.maximumf %5, %6 : vector<16x128xf32>
    %c0_6 = arith.constant 0 : index
    %c0_7 = arith.constant 0 : index
    %8 = vector.load %arg4[%c0_6, %c0_7] : memref<16x1xf32, #tpu.memory_space<vmem>>, vector<16x1xf32>
    %9 = vector.broadcast %8 : vector<16x1xf32> to vector<16x128xf32>
    %10 = arith.mulf %7, %9 : vector<16x128xf32>
    %cst_8 = arith.constant dense<0.000000e+00> : vector<128xf32>
    %11 = vector.multi_reduction <add>, %10, %cst_8 [0] : vector<16x128xf32> to vector<128xf32>
    %12 = vector.shape_cast %11 : vector<128xf32> to vector<1x128xf32>
    %c0_9 = arith.constant 0 : index
    %c0_10 = arith.constant 0 : index
    %13 = vector.load %arg5[%c0_9, %c0_10] : memref<1x1xf32, #tpu.memory_space<vmem>>, vector<1x1xf32>
    %14 = vector.broadcast %13 : vector<1x1xf32> to vector<1x128xf32>
    %15 = arith.addf %12, %14 : vector<1x128xf32>
    %c0_11 = arith.constant 0 : index
    %c0_12 = arith.constant 0 : index
    %16 = vector.load %arg6[%c0_11, %c0_12] : memref<1x128xf32, #tpu.memory_space<vmem>>, vector<1x128xf32>
    tpu.vector_store %arg6[%c0_11, %c0_12], %15 {strides = array<i32>} : memref<1x128xf32, #tpu.memory_space<vmem>>, vector<1x128xf32>,
    return
  }
  func.func @transform_0(%arg0: i32) -> (i32, i32) {
    %c0_i32 = arith.constant 0 : i32
    %c0_i32_0 = arith.constant 0 : i32
    return %c0_i32, %arg0 : i32, i32
  }
  func.func @transform_1(%arg0: i32) -> (i32, i32) {
    %c0_i32 = arith.constant 0 : i32
    %c0_i32_0 = arith.constant 0 : i32
    %c0_i32_1 = arith.constant 0 : i32
    return %c0_i32, %c0_i32_0 : i32, i32
  }
  func.func @transform_2(%arg0: i32) -> (i32, i32) {
    %c0_i32 = arith.constant 0 : i32
    %c0_i32_0 = arith.constant 0 : i32
    %c0_i32_1 = arith.constant 0 : i32
    return %c0_i32, %c0_i32_0 : i32, i32
  }
  func.func @transform_3(%arg0: i32) -> (i32, i32) {
    %c0_i32 = arith.constant 0 : i32
    %c0_i32_0 = arith.constant 0 : i32
    %c0_i32_1 = arith.constant 0 : i32
    return %c0_i32, %c0_i32_0 : i32, i32
  }
  func.func @transform_4(%arg0: i32) -> (i32, i32) {
    %c0_i32 = arith.constant 0 : i32
    %c0_i32_0 = arith.constant 0 : i32
    %c0_i32_1 = arith.constant 0 : i32
    return %c0_i32, %c0_i32_0 : i32, i32
  }
  func.func @transform_5(%arg0: i32) -> (i32, i32) {
    %c0_i32 = arith.constant 0 : i32
    %c0_i32_0 = arith.constant 0 : i32
    return %c0_i32, %arg0 : i32, i32
  }
}

</mosaic_0001>

<llo_original>
// kernel: tpu_custom_call.1
$region0: #{tpu_custom_call.1}
  #allocation0 [shape = 'u32[]', space=smem, size = 0x4, offset = 0x4, fixed_abs, tag = 'smem constant byte address 0x4 - core index']
  #allocation1 [shape = 'u32[72,128]{1,0:T(1,128)}', space=vmem, size = 0x9000, scoped, tag = 'internal scratch']
  #allocation2 [shape = 'f32[1,1]{1,0:T(1,128)S(1)}', space=vmem, size = 0x200, scoped, tag = 'scoped memory for tpu_custom_call.1']
  %s0 = inlined_call_operand.vmem [shape: f32[4,128], index: 0, kind: input, shape index: {}]
  %s1 = inlined_call_operand.vmem [shape: f32[16,4], index: 1, kind: input, shape index: {}]
  %s2 = inlined_call_operand.vmem [shape: f32[16,1], index: 2, kind: input, shape index: {}]
  %s3 = inlined_call_operand.vmem [shape: f32[16,1], index: 3, kind: input, shape index: {}]
  %s4 = inlined_call_operand.<no memory space> [shape: f32[1,1], index: 4, kind: input, shape index: {}]
  %s5 = inlined_call_operand.hbm [shape: f32[1,128], index: 5, kind: output, shape index: {}]
  %s6 = sld [smem:[#allocation0]]
  $region30: #{tpu_custom_call.1} parent=0
    _
  %s8 = ssub.s32 1, %s6
  %s9 = scalar_select 0, %s8, %s6
  %v10 = vstv %s4
  %11 = vst [vmem:[#allocation2] sm:$0x1] %v10
  $region1: #{tpu_custom_call.1} parent=0
    #allocation3 [shape = 'u8[512]{0}', space=vmem, size = 0x400, scoped, tag = 'output window, operand 0, single buffered']
    #allocation4 [shape = 's32[1]{0}', space=sflag, size = 0x4, scoped, tag = 'scoped memory for tpu_custom_call.1']
    %12 = vsyncpa [#allocation4], 0
    // Predicated region
    $region2: #{tpu_custom_call.1} parent=1 // pred_check
      _
    $region3: #{tpu_custom_call.1} parent=1 // pred_check_branch
      %14 = sbr.rel (0) target = $region5
    $region4: #{tpu_custom_call.1} parent=1 // pred_region
      _
    $region5: #{tpu_custom_call.1} parent=1 // pred_fallthru
      _
    // Predicated region
    $region6: #{tpu_custom_call.1} parent=1 // pred_check
      _
    $region7: #{tpu_custom_call.1} parent=1 // pred_check_branch
      %16 = sbr.rel (0) target = $region9
    $region8: #{tpu_custom_call.1} parent=1 // pred_region
      _
    $region9: #{tpu_custom_call.1} parent=1 // pred_fallthru
      _
    // Predicated region
    $region10: #{tpu_custom_call.1} parent=1 // pred_check
      _
    $region11: #{tpu_custom_call.1} parent=1 // pred_check_branch
      %18 = sbr.rel (0) target = $region13
    $region12: #{tpu_custom_call.1} parent=1 // pred_region
      _
    $region13: #{tpu_custom_call.1} parent=1 // pred_fallthru
      _
    // Predicated region
    $region14: #{tpu_custom_call.1} parent=1 // pred_check
      _
    $region15: #{tpu_custom_call.1} parent=1 // pred_check_branch
      %20 = sbr.rel (0) target = $region17
    $region16: #{tpu_custom_call.1} parent=1 // pred_region
      _
    $region17: #{tpu_custom_call.1} parent=1 // pred_fallthru
      _
    // Predicated region
    $region18: #{tpu_custom_call.1} parent=1 // pred_check
      _
    $region19: #{tpu_custom_call.1} parent=1 // pred_check_branch
      %22 = sbr.rel (0) target = $region21
    $region20: #{tpu_custom_call.1} parent=1 // pred_region
      _
    $region21: #{tpu_custom_call.1} parent=1 // pred_fallthru
      _
    %v23 = vld [vmem:[%s0] sm:$0xf]
    %v24 = vld [vmem:[%s1] sm:$0xff]
    %v25 = vld [vmem:[%s1 + $0x8] sm:$0xff]
    %v26 = vld [vmem:[%s2] sm:$0xff]
    %v27 = vld [vmem:[%s2 + $0x8] sm:$0xff]
    %29 = vset.pattern.permute.xlu0 0
    %30 = vperm.xlu0 %29, %v26
    %v31 = vpop.permute.xlu0 %30
    %34 = vset.pattern.permute.xlu0 0
    %35 = vperm.xlu0 %34, %v27
    %v36 = vpop.permute.xlu0 %35
    %vm38 = vcmask 31744
    %v40 = vsel %vm38, %v24, 0
    %v43 = vsel %vm38, %v25, 0
    %vm45 = vcmask 1043456
    %v47 = vsel %vm45, %v23, 0
    %49 = vmatpush.msra.mxu0 0.0
    %50 = vmatpush.msra.mxu0 0.0
    %51 = vmatpush.msra.mxu0 0.0
    %52 = vmatpush.msra.mxu0 0.0
    %53 = vmatpush.msra.mxu0 0.0
    %54 = vmatpush.msra.mxu0 0.0
    %55 = vmatpush.msra.mxu0 0.0
    %56 = vmatpush.msra.mxu0 0.0
    %57 = vmatpush.msra.mxu0 0.0
    %58 = vmatpush.msra.mxu0 0.0
    %59 = vmatpush.msra.mxu0 0.0
    %60 = vmatpush.msra.mxu0 0.0
    %61 = vmatpush.msra.mxu0 0.0
    %62 = vmatpush.msra.mxu0 0.0
    %63 = vmatpush.msra.mxu0 0.0
    %64 = vmatpush.msra.mxu0 %v47
    %65 = vmatmul.f32.gmra.mxu0 %v40
    %v66 = vpop.f32.mrf.mxu0
    %v67 = vadd.f32 %v31, %v66
    %68 = vmatmul.f32.gmra.mxu0 %v43
    %v69 = vpop.f32.mrf.mxu0
    %v70 = vadd.f32 %v36, %v69
    %71 = vdwg.mxu0
    %v72 = vmax.f32 %v67, 0.0
    %v73 = vmax.f32 %v70, 0.0
    %v74 = vld [vmem:[%s3] sm:$0xff]
    %v75 = vld [vmem:[%s3 + $0x8] sm:$0xff]
    %77 = vset.pattern.permute.xlu0 0
    %78 = vperm.xlu0 %77, %v74
    %v79 = vpop.permute.xlu0 %78
    %82 = vset.pattern.permute.xlu0 0
    %83 = vperm.xlu0 %82, %v75
    %v84 = vpop.permute.xlu0 %83
    %v86 = vmul.f32 %v72, %v79
    %v87 = vmul.f32 %v73, %v84
    %v88 = vadd.f32 %v86, %v87
    %v89 = vrot.slane %v88, 4
    %v90 = vadd.f32 %v88, %v89
    %v91 = vrot.slane %v90, 2
    %v92 = vadd.f32 %v90, %v91
    %v93 = vrot.slane %v92, 1
    %v94 = vadd.f32 %v92, %v93
    %v95 = vld [vmem:[#allocation2] sm:$0x1]
    %97 = vset.pattern.permute.xlu0 0
    %98 = vperm.xlu0 %97, %v95
    %v99 = vpop.permute.xlu0 %98
    %v101 = vperm.slane %v99, 0
    %v102 = vadd.f32 %v94, %v101
    %103 = vst [vmem:[#allocation3] sm:$0x1] %v102
    // Predicated region
    $region22: #{tpu_custom_call.1} parent=1 // pred_check
      _
    $region23: #{tpu_custom_call.1} parent=1 // pred_check_branch
      %105 = sbr.rel (0) target = $region25
    $region24: #{tpu_custom_call.1} parent=1 // pred_region
      %107 = vsyncadd [#allocation4], 0
      %s109 = sshll.u32 [#allocation3], 4
      %s110 = int_to_ptr.vmem [resolvable:$true] %s109
      %s111 = sshll.u32 %s5, 4
      %s112 = int_to_ptr.hbm [resolvable:$true] %s111
      %114 = dma.vmem_to_hbm [thread:$0]  %s110, 16, %s112, [#allocation4]
    $region25: #{tpu_custom_call.1} parent=1 // pred_fallthru
      _
    // Predicated region
    $region26: #{tpu_custom_call.1} parent=1 // pred_check
      _
    $region27: #{tpu_custom_call.1} parent=1 // pred_check_branch
      %116 = sbr.rel (0) target = $region29
    $region28: #{tpu_custom_call.1} parent=1 // pred_region
      %118 = dma.done [#allocation4], 16
    $region29: #{tpu_custom_call.1} parent=1 // pred_fallthru
      _
    %119 = vsyncpa [#allocation4], 1

</llo_original>
